<compile_context>
chip_gen: v5e
topology: v5e:2x2
jax: 0.10.0
libtpu: 0.0.40
codegen_flags: <defaults>
</compile_context>

<pallas_src>
import functools
import math

import jax
import jax.numpy as jnp
from jax import lax
from jax.experimental import pallas as pl
from jax.experimental.pallas import tpu as pltpu


_NEG_BIG = -1e30  # finite "minus infinity" for masking (avoids inf-inf NaNs)


def _round_up(x, m):
    return (x + m - 1) // m * m


def _vmem_limit_bytes():
    # Per-generation scoped VMEM limit (v5e/v6e: 128 MiB physical, v7x: 64 MiB)
    # with headroom; conservative fallback if the query fails.
    try:
        phys = int(pltpu.get_tpu_info().vmem_capacity_bytes)
    except Exception:
        phys = 64 * 1024 * 1024
    return (min(phys, 128 * 1024 * 1024) * 3) // 4


# ----------------------------------------------------------------------------
# Tiled projection matmul:  y = x @ w   (w already transposed to (K, N))
# Operands arrive in bf16 from the wrapper (no per-tile converts in-kernel).
# ----------------------------------------------------------------------------
def _matmul_kernel(x_ref, w_ref, o_ref, acc_ref):
    @pl.when(pl.program_id(2) == 0)
    def _():
        acc_ref[...] = jnp.zeros_like(acc_ref)

    acc_ref[...] += jnp.dot(
        x_ref[...], w_ref[...], preferred_element_type=jnp.float32
    )

    @pl.when(pl.program_id(2) == pl.num_programs(2) - 1)
    def _():
        o_ref[...] = acc_ref[...].astype(o_ref.dtype)


def _tiled_matmul(x, w, *, out_dtype=jnp.float32, tm=256, tn=256, tk=512):
    """x: (M, K), w: (K, N) -> (M, N).  Pads to tile multiples (zeros are exact)."""
    M, K = x.shape
    K2, N = w.shape
    assert K == K2
    tm = min(tm, _round_up(M, 8))
    tk = min(tk, _round_up(K, 128))
    tn = min(tn, _round_up(N, 128))
    Mp, Kp, Np = _round_up(M, tm), _round_up(K, tk), _round_up(N, tn)
    if (Mp, Kp) != (M, K):
        x = jnp.pad(x, ((0, Mp - M), (0, Kp - K)))
    if (Kp, Np) != (K, N):
        w = jnp.pad(w, ((0, Kp - K), (0, Np - N)))

    out = pl.pallas_call(
        _matmul_kernel,
        out_shape=jax.ShapeDtypeStruct((Mp, Np), out_dtype),
        grid_spec=pltpu.PrefetchScalarGridSpec(
            num_scalar_prefetch=0,
            grid=(Mp // tm, Np // tn, Kp // tk),
            in_specs=[
                pl.BlockSpec((tm, tk), lambda i, j, k: (i, k)),
                pl.BlockSpec((tk, tn), lambda i, j, k: (k, j)),
            ],
            out_specs=pl.BlockSpec((tm, tn), lambda i, j, k: (i, j)),
            scratch_shapes=[pltpu.VMEM((tm, tn), jnp.float32)],
        ),
        compiler_params=pltpu.CompilerParams(
            dimension_semantics=("parallel", "parallel", "arbitrary"),
            vmem_limit_bytes=_vmem_limit_bytes(),
        ),
    )(x, w)
    if (Mp, Np) != (M, N):
        out = out[:M, :N]
    return out


# ----------------------------------------------------------------------------
# In-place KV-cache update (input_output_aliases + manual DMA of new tokens).
# start_pos is a dynamic SMEM scalar -> no recompile per decode position.
# ----------------------------------------------------------------------------
def _kv_cache_update_kernel(new_k_ref, new_v_ref, start_ref, ck_in_ref, cv_in_ref,
                            ck_out_ref, cv_out_ref, sem):
    del ck_in_ref, cv_in_ref  # present only so the caches can be aliased in place
    b = pl.program_id(0)
    h = pl.program_id(1)
    sp = start_ref[0]
    seq_len = new_k_ref.shape[2]
    k_copy = pltpu.make_async_copy(
        new_k_ref.at[0, 0],
        ck_out_ref.at[b, h, pl.ds(sp, seq_len)],
        sem.at[0],
    )
    v_copy = pltpu.make_async_copy(
        new_v_ref.at[0, 0],
        cv_out_ref.at[b, h, pl.ds(sp, seq_len)],
        sem.at[1],
    )
    k_copy.start()
    v_copy.start()
    k_copy.wait()
    v_copy.wait()


def _kv_cache_update(new_k, new_v, start_pos_arr, cache_k, cache_v):
    """new_k/new_v: (B, n_kv, S, hd) bf16; caches: (maxB, n_kv, max_seq, hd) bf16."""
    B, n_kv, S, hd = new_k.shape
    return pl.pallas_call(
        _kv_cache_update_kernel,
        out_shape=(
            jax.ShapeDtypeStruct(cache_k.shape, cache_k.dtype),
            jax.ShapeDtypeStruct(cache_v.shape, cache_v.dtype),
        ),
        grid=(B, n_kv),
        in_specs=[
            pl.BlockSpec((1, 1, S, hd), lambda b, h: (b, h, 0, 0)),
            pl.BlockSpec((1, 1, S, hd), lambda b, h: (b, h, 0, 0)),
            pl.BlockSpec(memory_space=pltpu.MemorySpace.SMEM),
            pl.BlockSpec(memory_space=pl.ANY),
            pl.BlockSpec(memory_space=pl.ANY),
        ],
        out_specs=(
            pl.BlockSpec(memory_space=pl.ANY),
            pl.BlockSpec(memory_space=pl.ANY),
        ),
        scratch_shapes=[pltpu.SemaphoreType.DMA((2,))],
        input_output_aliases={3: 0, 4: 1},
        compiler_params=pltpu.CompilerParams(
            dimension_semantics=("parallel", "arbitrary"),
            vmem_limit_bytes=_vmem_limit_bytes(),
        ),
    )(new_k, new_v, start_pos_arr, cache_k, cache_v)


# ----------------------------------------------------------------------------
# Flash attention over the KV cache, GQA group folded into the query (M) axis.
# kv_len is a scalar-prefetch operand: KV index_map clamps to the last valid
# tile (no wasted DMA) and pl.when skips compute on tiles past kv_len.
# ----------------------------------------------------------------------------
def _flash_attn_kernel(kv_len_ref, q_ref, k_ref, v_ref, o_ref,
                       m_sc, l_sc, acc_sc, *, scale, tkv):
    kv_i = pl.program_id(3)
    kv_len = kv_len_ref[0]

    @pl.when(kv_i == 0)
    def _():
        m_sc[...] = jnp.full_like(m_sc, _NEG_BIG)
        l_sc[...] = jnp.zeros_like(l_sc)
        acc_sc[...] = jnp.zeros_like(acc_sc)

    kv_start = kv_i * tkv

    @pl.when(kv_start < kv_len)
    def _():
        q = q_ref[0, 0]                          # (tq, hd)  bf16
        k = k_ref[0, 0]                          # (tkv, hd) bf16
        v = v_ref[0, 0]                          # (tkv, hd) bf16

        s = lax.dot_general(
            q, k, (((1,), (1,)), ((), ())), preferred_element_type=jnp.float32
        ) * scale                                # (tq, tkv) f32
        col = kv_start + lax.broadcasted_iota(jnp.int32, s.shape, 1)
        s = jnp.where(col < kv_len, s, _NEG_BIG)

        m_prev = m_sc[...]
        m_new = jnp.maximum(m_prev, jnp.max(s, axis=-1, keepdims=True))
        alpha = jnp.exp(m_prev - m_new)
        p = jnp.exp(s - m_new)
        l_sc[...] = alpha * l_sc[...] + jnp.sum(p, axis=-1, keepdims=True)
        acc_sc[...] = alpha * acc_sc[...] + jnp.dot(
            p.astype(jnp.bfloat16), v, preferred_element_type=jnp.float32
        )
        m_sc[...] = m_new

    @pl.when(kv_i == pl.num_programs(3) - 1)
    def _():
        inv = pl.reciprocal(l_sc[...], approx=True)
        o_ref[0, 0] = (acc_sc[...] * inv).astype(o_ref.dtype)


def _pick_tkv(max_seq, hd, tq, vmem_limit):
    """Largest power-of-two KV tile that fits the VMEM budget and divides max_seq."""
    budget = vmem_limit // 2

    def usage(t):
        return (2 * 2 * t * hd * 2          # K, V double-buffered (bf16)
                + tq * t * 4                # (tq, tkv) f32 score slab
                + 2 * tq * hd * 2           # q block double-buffered (bf16)
                + tq * hd * 4 + 2 * tq * 4)  # f32 accumulator + m/l

    cap = 2048
    while cap > 128 and usage(cap) > budget:
        cap //= 2
    if max_seq <= cap:
        return max_seq
    t = cap
    while t > 8 and max_seq % t:
        t //= 2
    return t if max_seq % t == 0 else max_seq


def _flash_attention(q, k_cache, v_cache, kv_len_arr, *, scale):
    """q: (B, n_kv, Mq, hd) bf16; caches: (maxB, n_kv, max_seq, hd) bf16."""
    B, n_kv, Mq, hd = q.shape
    max_seq = k_cache.shape[2]
    limit = _vmem_limit_bytes()

    # Query-axis tiling bounds the (tq, tkv) score slab + accumulator (v7x VMEM).
    tq = Mq if Mq <= 512 else 256
    Mq_p = _round_up(Mq, tq)
    if Mq_p != Mq:
        q = jnp.pad(q, ((0, 0), (0, 0), (0, Mq_p - Mq), (0, 0)))
    num_q = Mq_p // tq

    tkv = _pick_tkv(max_seq, hd, tq, limit)
    num_kv = max(1, max_seq // tkv)

    def kv_index_map(b, g, qi, kv, kvl_ref):
        # Clamp to the last tile containing valid tokens: grid steps past
        # kv_len revisit the same block (no extra DMA) and are skipped by
        # pl.when inside the kernel.
        last = jnp.maximum(kvl_ref[0] - 1, 0) // tkv
        return (b, g, jnp.minimum(kv, last), 0)

    kernel = functools.partial(_flash_attn_kernel, scale=scale, tkv=tkv)
    out = pl.pallas_call(
        kernel,
        out_shape=jax.ShapeDtypeStruct((B, n_kv, Mq_p, hd), jnp.bfloat16),
        grid_spec=pltpu.PrefetchScalarGridSpec(
            num_scalar_prefetch=1,
            grid=(B, n_kv, num_q, num_kv),
            in_specs=[
                pl.BlockSpec((1, 1, tq, hd), lambda b, g, qi, kv, kvl: (b, g, qi, 0)),
                pl.BlockSpec((1, 1, tkv, hd), kv_index_map),
                pl.BlockSpec((1, 1, tkv, hd), kv_index_map),
            ],
            out_specs=pl.BlockSpec((1, 1, tq, hd),
                                   lambda b, g, qi, kv, kvl: (b, g, qi, 0)),
            scratch_shapes=[
                pltpu.VMEM((tq, 1), jnp.float32),
                pltpu.VMEM((tq, 1), jnp.float32),
                pltpu.VMEM((tq, hd), jnp.float32),
            ],
        ),
        compiler_params=pltpu.CompilerParams(
            dimension_semantics=("parallel", "parallel", "parallel", "arbitrary"),
            vmem_limit_bytes=limit,
        ),
    )(kv_len_arr, q, k_cache, v_cache)
    if Mq_p != Mq:
        out = out[:, :, :Mq, :]
    return out


# ----------------------------------------------------------------------------
# JAX glue (rotary, reference-only repeat_kv) — elementwise / layout only
# TODO(synk): fuse rotary into a Pallas epilogue (pltpu.roll even/odd swizzle)
#             to avoid the strided-slice gather + extra HBM round trip.
# ----------------------------------------------------------------------------
def apply_rotary_embeddings(x, cos, sin):
    # x: (B, S, H, hd); cos/sin: (S, hd // 2); interleaved (even/odd) pairs.
    xr = x[..., 0::2]
    xi = x[..., 1::2]
    c = cos[None, :, None, :]
    s = sin[None, :, None, :]
    out_r = xr * c - xi * s
    out_i = xr * s + xi * c
    return jnp.stack([out_r, out_i], axis=-1).reshape(x.shape).astype(x.dtype)


def repeat_kv(x, n_rep):
    # Reference-path only; the Pallas attention kernel never materializes this.
    if n_rep == 1:
        return x
    b, s, h, d = x.shape
    return jnp.broadcast_to(x[:, :, :, None, :], (b, s, h, n_rep, d)).reshape(
        b, s, h * n_rep, d
    )


# ----------------------------------------------------------------------------
# Module
# ----------------------------------------------------------------------------
class SelfAttentionPallas:
    def __init__(self, dim, n_heads, n_kv_heads, max_batch_size, max_seq_length, key):
        self.n_heads = n_heads
        self.n_kv_heads = n_kv_heads if n_kv_heads is not None else n_heads
        self.n_rep = n_heads // self.n_kv_heads
        self.head_dim = dim // n_heads
        self.dim = dim

        k0, k1, k2, k3 = jax.random.split(key, 4)
        scale = 1.0 / math.sqrt(dim)
        # nn.Linear weight layout: (out_features, in_features)
        self.wq = jax.random.normal(k0, (n_heads * self.head_dim, dim), jnp.float32) * scale
        self.wk = jax.random.normal(k1, (self.n_kv_heads * self.head_dim, dim), jnp.float32) * scale
        self.wv = jax.random.normal(k2, (self.n_kv_heads * self.head_dim, dim), jnp.float32) * scale
        self.wo = jax.random.normal(k3, (dim, n_heads * self.head_dim), jnp.float32) * scale

        # Fused, pre-transposed, bf16 weights for the Pallas matmul kernels.
        self.wqkv_t = jnp.concatenate([self.wq, self.wk, self.wv], axis=0).T.astype(jnp.bfloat16)
        self.wo_t = self.wo.T.astype(jnp.bfloat16)

        # bf16 KV cache stored head-major so the attention kernel reads it
        # directly with (1, 1, tkv, hd) blocks: (maxB, n_kv, max_seq, hd).
        self.cache_k = jnp.zeros(
            (max_batch_size, self.n_kv_heads, max_seq_length, self.head_dim),
            jnp.bfloat16,
        )
        self.cache_v = jnp.zeros_like(self.cache_k)

    def __call__(self, x, start_pos, cos, sin):
        B, S, D = x.shape
        hd = self.head_dim
        q_dim = self.n_heads * hd
        kv_dim = self.n_kv_heads * hd

        # Fused QKV projection (bf16 activations in the wrapper, f32 accumulation).
        x2d = x.reshape(B * S, D).astype(jnp.bfloat16)
        qkv = _tiled_matmul(x2d, self.wqkv_t, out_dtype=jnp.float32)
        xq = qkv[:, :q_dim].reshape(B, S, self.n_heads, hd)
        xk = qkv[:, q_dim:q_dim + kv_dim].reshape(B, S, self.n_kv_heads, hd)
        xv = qkv[:, q_dim + kv_dim:].reshape(B, S, self.n_kv_heads, hd)

        xq = apply_rotary_embeddings(xq, cos, sin)
        xk = apply_rotary_embeddings(xk, cos, sin)

        # New tokens only -> cache layout (B, n_kv, S, hd), bf16, written in place
        # at a dynamic start_pos (no recompile per position).
        xk_t = jnp.transpose(xk, (0, 2, 1, 3)).astype(jnp.bfloat16)
        xv_t = jnp.transpose(xv, (0, 2, 1, 3)).astype(jnp.bfloat16)
        start_arr = jnp.asarray([start_pos], jnp.int32)
        self.cache_k, self.cache_v = _kv_cache_update(
            xk_t, xv_t, start_arr, self.cache_k, self.cache_v
        )

        # GQA fold: (B, S, H, hd) -> (B, n_kv, n_rep*S, hd) so every KV tile is
        # streamed once per KV head.  (No causal mask, matching the PyTorch module.)
        q_f = jnp.transpose(
            xq.reshape(B, S, self.n_kv_heads, self.n_rep, hd), (0, 2, 3, 1, 4)
        ).reshape(B, self.n_kv_heads, self.n_rep * S, hd).astype(jnp.bfloat16)

        kv_len_arr = jnp.asarray([start_pos + S], jnp.int32)
        out = _flash_attention(
            q_f, self.cache_k, self.cache_v, kv_len_arr,
            scale=1.0 / math.sqrt(hd),
        )                                        # (B, n_kv, n_rep*S, hd) bf16

        # Unfold back to a lane-dense (B*S, H*hd) slab for the output projection.
        out2d = jnp.transpose(
            out.reshape(B, self.n_kv_heads, self.n_rep, S, hd), (0, 3, 1, 2, 4)
        ).reshape(B * S, self.n_heads * hd)
        y = _tiled_matmul(out2d, self.wo_t, out_dtype=jnp.float32)
        return y.reshape(B, S, self.dim)


# ----------------------------------------------------------------------------
# Pure-JAX reference (bf16-aware, mirrors the kernel's numerics independently)
# ----------------------------------------------------------------------------
def _reference_step(wq, wk, wv, wo, n_heads, n_kv_heads, cache_k, cache_v,
                    x, start_pos, cos, sin):
    B, S, D = x.shape
    hd = D // n_heads
    n_rep = n_heads // n_kv_heads
    bf = jnp.bfloat16

    x2d = x.reshape(B * S, D).astype(bf)
    xq = jnp.dot(x2d, wq.T.astype(bf), preferred_element_type=jnp.float32).reshape(B, S, n_heads, hd)
    xk = jnp.dot(x2d, wk.T.astype(bf), preferred_element_type=jnp.float32).reshape(B, S, n_kv_heads, hd)
    xv = jnp.dot(x2d, wv.T.astype(bf), preferred_element_type=jnp.float32).reshape(B, S, n_kv_heads, hd)
    xq = apply_rotary_embeddings(xq, cos, sin)
    xk = apply_rotary_embeddings(xk, cos, sin)

    cache_k = lax.dynamic_update_slice(cache_k, xk, (0, start_pos, 0, 0))
    cache_v = lax.dynamic_update_slice(cache_v, xv, (0, start_pos, 0, 0))
    keys = repeat_kv(cache_k[:B, : start_pos + S], n_rep)
    values = repeat_kv(cache_v[:B, : start_pos + S], n_rep)

    q = jnp.transpose(xq, (0, 2, 1, 3)).astype(bf)
    k = jnp.transpose(keys, (0, 2, 1, 3)).astype(bf)
    v = jnp.transpose(values, (0, 2, 1, 3)).astype(bf)
    scores = jnp.einsum("bhqd,bhkd->bhqk", q, k,
                        preferred_element_type=jnp.float32) / math.sqrt(hd)
    p = jax.nn.softmax(scores, axis=-1)
    o = jnp.einsum("bhqk,bhkd->bhqd", p.astype(bf), v,
                   preferred_element_type=jnp.float32)
    o2d = jnp.transpose(o, (0, 2, 1, 3)).reshape(B * S, n_heads * hd).astype(bf)
    out = jnp.dot(o2d, wo.T.astype(bf),
                  preferred_element_type=jnp.float32).reshape(B, S, D)
    return out, cache_k, cache_v


if __name__ == "__main__":
    B, S1, S2, dim = 2, 8, 4, 32
    n_heads, n_kv_heads = 4, 2
    head_dim = dim // n_heads
    max_batch, max_seq = 4, 16

    key = jax.random.PRNGKey(0)
    kx1, kx2, kw = jax.random.split(key, 3)
    x1 = jax.random.normal(kx1, (B, S1, dim), jnp.float32)
    x2 = jax.random.normal(kx2, (B, S2, dim), jnp.float32)

    def rope_tables(start, length):
        inv_freq = 1.0 / (10000.0 ** (jnp.arange(0, head_dim, 2, dtype=jnp.float32) / head_dim))
        pos = jnp.arange(start, start + length, dtype=jnp.float32)
        ang = pos[:, None] * inv_freq[None, :]
        return jnp.cos(ang), jnp.sin(ang)

    cos1, sin1 = rope_tables(0, S1)
    cos2, sin2 = rope_tables(S1, S2)

    attn = SelfAttentionPallas(dim, n_heads, n_kv_heads, max_batch, max_seq, kw)

    # Two sequential calls: prefill at position 0, then a chunk at start_pos=S1
    # (exercises the in-place cache write, GQA fold and dynamic kv_len masking).
    out1 = attn(x1, 0, cos1, sin1)
    out2 = attn(x2, S1, cos2, sin2)
    out1 = jax.block_until_ready(out1)
    out2 = jax.block_until_ready(out2)

    # Independent XLA reference with its own (B, S, n_kv, hd)-layout f32 cache.
    ref_ck = jnp.zeros((max_batch, max_seq, n_kv_heads, head_dim), jnp.float32)
    ref_cv = jnp.zeros_like(ref_ck)
    ref1, ref_ck, ref_cv = _reference_step(
        attn.wq, attn.wk, attn.wv, attn.wo, n_heads, n_kv_heads,
        ref_ck, ref_cv, x1, 0, cos1, sin1)
    ref2, ref_ck, ref_cv = _reference_step(
        attn.wq, attn.wk, attn.wv, attn.wo, n_heads, n_kv_heads,
        ref_ck, ref_cv, x2, S1, cos2, sin2)

    assert out1.shape == (B, S1, dim) and out2.shape == (B, S2, dim)
    assert jnp.allclose(out1, ref1, atol=3e-2, rtol=3e-2), float(jnp.max(jnp.abs(out1 - ref1)))
    assert jnp.allclose(out2, ref2, atol=3e-2, rtol=3e-2), float(jnp.max(jnp.abs(out2 - ref2)))

    print("KERNEL_OK")
</pallas_src>

<mosaic_0001>
module attributes {stable_mosaic.version = 11 : i64} {
  func.func @_matmul_kernel(%arg0: i32, %arg1: i32, %arg2: i32, %arg3: memref<16x128xbf16, #tpu.memory_space<vmem>>, %arg4: memref<128x128xbf16, #tpu.memory_space<vmem>>, %arg5: memref<16x128xf32, #tpu.memory_space<vmem>>, %arg6: memref<16x128xf32, #tpu.memory_space<vmem>>) attributes {dimension_semantics = [#tpu.dimension_semantics<parallel>, #tpu.dimension_semantics<parallel>, #tpu.dimension_semantics<arbitrary>], iteration_bounds = array<i64: 1, 1, 1>, scalar_prefetch = 0 : i64, scratch_operands = 1 : i64, tpu.core_type = #tpu.core_type<tc>, window_params = [{transform_indices = @transform_0, window_bounds = array<i64: 16, 128>}, {transform_indices = @transform_1, window_bounds = array<i64: 128, 128>}, {transform_indices = @transform_2, window_bounds = array<i64: 16, 128>}]} {
    %c0_i32 = arith.constant 0 : i32
    %0 = arith.cmpi eq, %arg2, %c0_i32 : i32
    %1 = arith.extui %0 : i1 to i32
    %c0_i32_0 = arith.constant 0 : i32
    %2 = arith.cmpi ne, %1, %c0_i32_0 : i32
    scf.if %2 {
      %cst_10 = arith.constant 0.000000e+00 : f32
      %12 = vector.broadcast %cst_10 : f32 to vector<16x128xf32>
      %c0_11 = arith.constant 0 : index
      %c0_12 = arith.constant 0 : index
      %13 = vector.load %arg6[%c0_11, %c0_12] : memref<16x128xf32, #tpu.memory_space<vmem>>, vector<16x128xf32>
      tpu.vector_store %arg6[%c0_11, %c0_12], %12 {strides = array<i32>} : memref<16x128xf32, #tpu.memory_space<vmem>>, vector<16x128xf32>,
    } else {
    }
    %c0 = arith.constant 0 : index
    %c0_1 = arith.constant 0 : index
    %3 = vector.load %arg6[%c0, %c0_1] : memref<16x128xf32, #tpu.memory_space<vmem>>, vector<16x128xf32>
    %c0_2 = arith.constant 0 : index
    %c0_3 = arith.constant 0 : index
    %4 = vector.load %arg3[%c0_2, %c0_3] : memref<16x128xbf16, #tpu.memory_space<vmem>>, vector<16x128xbf16>
    %c0_4 = arith.constant 0 : index
    %c0_5 = arith.constant 0 : index
    %5 = vector.load %arg4[%c0_4, %c0_5] : memref<128x128xbf16, #tpu.memory_space<vmem>>, vector<128x128xbf16>
    %cst = arith.constant dense<0.000000e+00> : vector<16x128xf32>
    %6 = tpu.matmul %4, %5, %cst {dimension_numbers = #tpu.dot_dimension_numbers<[1], [0], [0], [1], [0, 0, 1, 1], [], []>} : vector<16x128xbf16>, vector<128x128xbf16>, vector<16x128xf32> -> vector<16x128xf32>
    %7 = arith.addf %3, %6 : vector<16x128xf32>
    %c0_6 = arith.constant 0 : index
    %c0_7 = arith.constant 0 : index
    %8 = vector.load %arg6[%c0_6, %c0_7] : memref<16x128xf32, #tpu.memory_space<vmem>>, vector<16x128xf32>
    tpu.vector_store %arg6[%c0_6, %c0_7], %7 {strides = array<i32>} : memref<16x128xf32, #tpu.memory_space<vmem>>, vector<16x128xf32>,
    %c0_i32_8 = arith.constant 0 : i32
    %9 = arith.cmpi eq, %arg2, %c0_i32_8 : i32
    %10 = arith.extui %9 : i1 to i32
    %c0_i32_9 = arith.constant 0 : i32
    %11 = arith.cmpi ne, %10, %c0_i32_9 : i32
    scf.if %11 {
      %c0_10 = arith.constant 0 : index
      %c0_11 = arith.constant 0 : index
      %12 = vector.load %arg6[%c0_10, %c0_11] : memref<16x128xf32, #tpu.memory_space<vmem>>, vector<16x128xf32>
      %c0_12 = arith.constant 0 : index
      %c0_13 = arith.constant 0 : index
      %13 = vector.load %arg5[%c0_12, %c0_13] : memref<16x128xf32, #tpu.memory_space<vmem>>, vector<16x128xf32>
      tpu.vector_store %arg5[%c0_12, %c0_13], %12 {strides = array<i32>} : memref<16x128xf32, #tpu.memory_space<vmem>>, vector<16x128xf32>,
    } else {
    }
    return
  }
  func.func @transform_0(%arg0: i32, %arg1: i32, %arg2: i32) -> (i32, i32) {
    %c0_i32 = arith.constant 0 : i32
    return %arg0, %arg2 : i32, i32
  }
  func.func @transform_1(%arg0: i32, %arg1: i32, %arg2: i32) -> (i32, i32) {
    %c0_i32 = arith.constant 0 : i32
    return %arg2, %arg1 : i32, i32
  }
  func.func @transform_2(%arg0: i32, %arg1: i32, %arg2: i32) -> (i32, i32) {
    %c0_i32 = arith.constant 0 : i32
    return %arg0, %arg1 : i32, i32
  }
}

</mosaic_0001>

<llo_original>
// kernel: tpu_custom_call.1
$region0: #{tpu_custom_call.1}
  #allocation0 [shape = 'u32[]', space=smem, size = 0x4, offset = 0x4, fixed_abs, tag = 'smem constant byte address 0x4 - core index']
  #allocation1 [shape = 'u32[72,128]{1,0:T(1,128)}', space=vmem, size = 0x9000, scoped, tag = 'internal scratch']
  #allocation2 [shape = 'f32[16,128]{1,0:T(8,128)}', space=vmem, size = 0x2000, scoped, tag = 'scratch operand']
  %s0 = inlined_call_operand.hbm [shape: bf16[16,128], index: 0, kind: input, shape index: {}]
  %s1 = inlined_call_operand.hbm [shape: bf16[128,128], index: 1, kind: input, shape index: {}]
  %s2 = inlined_call_operand.hbm [shape: f32[16,128], index: 2, kind: output, shape index: {}]
  %s3 = sld [smem:[#allocation0]]
  $region34: #{tpu_custom_call.1} parent=0
    _
  %s5 = ssub.s32 1, %s3
  %s6 = scalar_select 0, %s5, %s3
  $region1: #{tpu_custom_call.1} parent=0
    #allocation3 [shape = 'u8[4096]{0}', space=vmem, size = 0x1000, scoped, tag = 'input window, operand 0, single buffered']
    #allocation4 [shape = 's32[1]{0}', space=sflag, size = 0x4, scoped, tag = 'scoped memory for tpu_custom_call.1']
    #allocation5 [shape = 's32[1]{0}', space=sflag, size = 0x4, scoped, tag = 'scoped memory for tpu_custom_call.1']
    #allocation6 [shape = 'u8[32768]{0}', space=vmem, size = 0x8000, scoped, tag = 'input window, operand 1, single buffered']
    #allocation7 [shape = 's32[1]{0}', space=sflag, size = 0x4, scoped, tag = 'scoped memory for tpu_custom_call.1']
    #allocation8 [shape = 'u8[8192]{0}', space=vmem, size = 0x2000, scoped, tag = 'output window, operand 0, single buffered']
    %7 = vsyncpa [#allocation4], 0
    %8 = vsyncpa [#allocation7], 0
    %9 = vsyncpa [#allocation5], 0
    // Predicated region
    $region2: #{tpu_custom_call.1} parent=1 // pred_check
      _
    $region3: #{tpu_custom_call.1} parent=1 // pred_check_branch
      %11 = sbr.rel (0) target = $region5
    $region4: #{tpu_custom_call.1} parent=1 // pred_region
      %13 = vsyncadd [#allocation4], 0
      %s14 = sshll.u32 %s0, 4
      %s15 = int_to_ptr.hbm [resolvable:$true] %s14
      %s16 = sshll.u32 [#allocation3], 4
      %s17 = int_to_ptr.vmem [resolvable:$true] %s16
      %22 = dma.hbm_to_vmem [thread:$0]  %s15, 128, %s17, [#allocation4], 64, 64, 4
    $region5: #{tpu_custom_call.1} parent=1 // pred_fallthru
      _
    // Predicated region
    $region6: #{tpu_custom_call.1} parent=1 // pred_check
      _
    $region7: #{tpu_custom_call.1} parent=1 // pred_check_branch
      %24 = sbr.rel (0) target = $region9
    $region8: #{tpu_custom_call.1} parent=1 // pred_region
      %26 = vsyncadd [#allocation7], 0
      %s27 = sshll.u32 %s1, 4
      %s28 = int_to_ptr.hbm [resolvable:$true] %s27
      %s29 = sshll.u32 [#allocation6], 4
      %s30 = int_to_ptr.vmem [resolvable:$true] %s29
      %35 = dma.hbm_to_vmem [thread:$0]  %s28, 1024, %s30, [#allocation7], 64, 64, 4
    $region9: #{tpu_custom_call.1} parent=1 // pred_fallthru
      _
    // Predicated region
    $region10: #{tpu_custom_call.1} parent=1 // pred_check
      _
    $region11: #{tpu_custom_call.1} parent=1 // pred_check_branch
      %37 = sbr.rel (0) target = $region13
    $region12: #{tpu_custom_call.1} parent=1 // pred_region
      %39 = dma.done [#allocation4], 128
    $region13: #{tpu_custom_call.1} parent=1 // pred_fallthru
      _
    // Predicated region
    $region14: #{tpu_custom_call.1} parent=1 // pred_check
      _
    $region15: #{tpu_custom_call.1} parent=1 // pred_check_branch
      %41 = sbr.rel (0) target = $region17
    $region16: #{tpu_custom_call.1} parent=1 // pred_region
      %43 = dma.done [#allocation7], 1024
    $region17: #{tpu_custom_call.1} parent=1 // pred_fallthru
      _
    %p44 = scmp.eq.s32.totalorder 0, 0
    // Predicated region
    $region18: #{tpu_custom_call.1} parent=1 // pred_check
      %p45 = pneg %p44
    $region19: #{tpu_custom_call.1} parent=1 // pred_check_branch
      %47 = sbr.rel (%p45) target = $region21
    $region20: #{tpu_custom_call.1} parent=1 // pred_region
      %48 = vst [vmem:[#allocation2] sm:$0xff] 0.0
      %49 = vst [vmem:[#allocation2 + $0x8] sm:$0xff] 0.0
    $region21: #{tpu_custom_call.1} parent=1 // pred_fallthru
      _
    %v50 = vld [vmem:[#allocation2] sm:$0xff]
    %v51 = vld [vmem:[#allocation2 + $0x8] sm:$0xff]
    %v52 = vld [vmem:[#allocation3] sm:$0xf]
    %v53 = vld [vmem:[#allocation3 + $0x4] sm:$0xf]
    %v54 = vld [vmem:[#allocation6] sm:$0xf]
    %v55 = vld [vmem:[#allocation6 + $0x4] sm:$0xf]
    %v56 = vld [vmem:[#allocation6 + $0x8] sm:$0xf]
    %v57 = vld [vmem:[#allocation6 + $0xc] sm:$0xf]
    %v58 = vld [vmem:[#allocation6 + $0x10] sm:$0xf]
    %v59 = vld [vmem:[#allocation6 + $0x14] sm:$0xf]
    %v60 = vld [vmem:[#allocation6 + $0x18] sm:$0xf]
    %v61 = vld [vmem:[#allocation6 + $0x1c] sm:$0xf]
    %v62 = vld [vmem:[#allocation6 + $0x20] sm:$0xf]
    %v63 = vld [vmem:[#allocation6 + $0x24] sm:$0xf]
    %v64 = vld [vmem:[#allocation6 + $0x28] sm:$0xf]
    %v65 = vld [vmem:[#allocation6 + $0x2c] sm:$0xf]
    %v66 = vld [vmem:[#allocation6 + $0x30] sm:$0xf]
    %v67 = vld [vmem:[#allocation6 + $0x34] sm:$0xf]
    %v68 = vld [vmem:[#allocation6 + $0x38] sm:$0xf]
    %v69 = vld [vmem:[#allocation6 + $0x3c] sm:$0xf]
    %v72 = vunpack.c.l.b16 %v52
    %v73 = vunpack.c.l.b16 %v53
    %v74 = vpack.c.b16 %v73, %v72
    %v92 = vunpack.c.l.b16 %v54
    %v93 = vunpack.c.l.b16 %v55
    %v94 = vunpack.c.l.b16 %v56
    %v95 = vunpack.c.l.b16 %v57
    %v96 = vunpack.c.l.b16 %v58
    %v97 = vunpack.c.l.b16 %v59
    %v98 = vunpack.c.l.b16 %v60
    %v99 = vunpack.c.l.b16 %v61
    %v100 = vunpack.c.l.b16 %v62
    %v101 = vunpack.c.l.b16 %v63
    %v102 = vunpack.c.l.b16 %v64
    %v103 = vunpack.c.l.b16 %v65
    %v104 = vunpack.c.l.b16 %v66
    %v105 = vunpack.c.l.b16 %v67
    %v106 = vunpack.c.l.b16 %v68
    %v107 = vunpack.c.l.b16 %v69
    %v108 = vpack.c.b16 %v93, %v92
    %v109 = vpack.c.b16 %v95, %v94
    %v110 = vpack.c.b16 %v97, %v96
    %v111 = vpack.c.b16 %v99, %v98
    %v112 = vpack.c.b16 %v101, %v100
    %v113 = vpack.c.b16 %v103, %v102
    %v114 = vpack.c.b16 %v105, %v104
    %v115 = vpack.c.b16 %v107, %v106
    %124 = vmatpush.bf16.msra.mxu0 %v115
    %125 = vmatpush.bf16.msra.mxu0 %v114
    %126 = vmatpush.bf16.msra.mxu0 %v113
    %127 = vmatpush.bf16.msra.mxu0 %v112
    %128 = vmatpush.bf16.msra.mxu0 %v111
    %129 = vmatpush.bf16.msra.mxu0 %v110
    %130 = vmatpush.bf16.msra.mxu0 %v109
    %131 = vmatpush.bf16.msra.mxu0 %v108
    %132 = vmatmul.bf16.gmra.mxu0 %v74
    %v133 = vpop.f32.mrf.mxu0
    %v134 = vadd.f32 0.0, %v133
    %v135 = vpop.f32.mrf.mxu0
    %v136 = vadd.f32 0.0, %v135
    %137 = vdwg.mxu0
    %v138 = vadd.f32 %v50, %v134
    %v139 = vadd.f32 %v51, %v136
    %140 = vst [vmem:[#allocation2] sm:$0xff] %v138
    %141 = vst [vmem:[#allocation2 + $0x8] sm:$0xff] %v139
    // Predicated region
    $region22: #{tpu_custom_call.1} parent=1 // pred_check
      %p142 = pneg %p44
    $region23: #{tpu_custom_call.1} parent=1 // pred_check_branch
      %144 = sbr.rel (%p142) target = $region25
    $region24: #{tpu_custom_call.1} parent=1 // pred_region
      %v145 = vld [vmem:[#allocation2] sm:$0xff]
      %v146 = vld [vmem:[#allocation2 + $0x8] sm:$0xff]
      %147 = vst [vmem:[#allocation8] sm:$0xff] %v145
      %148 = vst [vmem:[#allocation8 + $0x8] sm:$0xff] %v146
    $region25: #{tpu_custom_call.1} parent=1 // pred_fallthru
      _
    // Predicated region
    $region26: #{tpu_custom_call.1} parent=1 // pred_check
      _
    $region27: #{tpu_custom_call.1} parent=1 // pred_check_branch
      %150 = sbr.rel (0) target = $region29
    $region28: #{tpu_custom_call.1} parent=1 // pred_region
      %152 = vsyncadd [#allocation5], 0
      %s153 = sshll.u32 [#allocation8], 4
      %s154 = int_to_ptr.vmem [resolvable:$true] %s153
      %s155 = sshll.u32 %s2, 4
      %s156 = int_to_ptr.hbm [resolvable:$true] %s155
      %161 = dma.vmem_to_hbm [thread:$0]  %s154, 256, %s156, [#allocation5], 128, 128, 8
    $region29: #{tpu_custom_call.1} parent=1 // pred_fallthru
      _
    // Predicated region
    $region30: #{tpu_custom_call.1} parent=1 // pred_check
      _
    $region31: #{tpu_custom_call.1} parent=1 // pred_check_branch
      %163 = sbr.rel (0) target = $region33
    $region32: #{tpu_custom_call.1} parent=1 // pred_region
      %165 = dma.done [#allocation5], 256
    $region33: #{tpu_custom_call.1} parent=1 // pred_fallthru
      _
    %166 = vsyncpa [#allocation4], 1
    %167 = vsyncpa [#allocation7], 1
    %168 = vsyncpa [#allocation5], 1

</llo_original>
